<compile_context>
chip_gen: v7x
topology: tpu7x:2x2x1
jax: 0.10.0
libtpu: 0.0.40
codegen_flags: <defaults>
</compile_context>

<pallas_src>
import functools

import jax
import jax.numpy as jnp
from jax.experimental import pallas as pl
from jax.experimental.pallas import tpu as pltpu


def _label_smoothing_loss_kernel(pred_ref, tgt_ref, loss_ref, *,
                                 smoothing: float, num_classes: int):
    # pred_ref: (TB, C) float (native dtype), tgt_ref: (TB, 1) int32,
    # loss_ref: (TB, 1) f32 per-row losses (padded rows sliced off by the wrapper).
    pred = pred_ref[...].astype(jnp.float32)                      # (TB, C)
    tb, c = pred.shape
    tgt = tgt_ref[...]                                            # (TB, 1) int32

    # Numerically stable logsumexp pieces.
    row_max = jnp.max(pred, axis=-1, keepdims=True)               # (TB, 1)
    shifted = pred - row_max                                      # (TB, C)
    lse = jnp.log(jnp.sum(jnp.exp(shifted), axis=-1, keepdims=True))  # (TB, 1)

    confidence = jnp.float32(1.0 - smoothing)
    off = jnp.float32(smoothing / (num_classes - 1)) if num_classes > 1 \
        else jnp.float32(0.0)

    # Fused smoothed-label weighting: weights sum to 1 per row, so
    #   loss_i = lse_i - sum_c w[i,c] * shifted[i,c]
    col_ids = jax.lax.broadcasted_iota(jnp.int32, (tb, c), 1)     # (TB, C)
    w = jnp.where(col_ids == tgt, confidence, off)                # (TB, C)
    weighted = jnp.sum(w * shifted, axis=-1, keepdims=True)       # (TB, 1)

    loss_ref[...] = lse - weighted                                # (TB, 1) f32


def _vmem_capacity_bytes() -> int:
    """Physical VMEM of the current generation; conservative v7x fallback."""
    try:
        info = pltpu.get_tpu_info()
        cap = getattr(info, "vmem_capacity_bytes", None)
        if cap:
            return int(cap)
    except Exception:
        pass
    return 64 * 1024 * 1024


def _choose_batch_tile(b: int, c: int, itemsize: int, vmem_cap: int) -> int:
    # Footprint per row: 2x double-buffered native-dtype input row plus ~6 live
    # f32 (TB,C)-shaped temporaries (f32 cast, shifted, exp, iota, weights, product).
    per_row_bytes = c * (2 * itemsize + 6 * 4) + 16
    budget = (vmem_cap * 6) // 10                     # ~60% of physical VMEM
    rows = budget // max(1, per_row_bytes)
    # Keep individual input DMA blocks at or below ~16 MiB (past the HBM-roofline knee).
    rows = min(rows, max(1, (16 * 1024 * 1024) // max(1, c * itemsize)))
    rows = max(32, (rows // 32) * 32)                 # sublane packing for all dtypes
    if b <= rows:
        return b          # single tile: block == full array dim is always legal
    return rows           # multiple of 32 -> satisfies layout / (8,128) block rules


def label_smoothing_loss(pred: jax.Array, target: jax.Array, *, classes: int,
                         smoothing: float = 0.0,
                         batch_tile: int | None = None) -> jax.Array:
    """Pallas TPU implementation of LabelSmoothingLoss.forward.

    pred:   (B, C) float array of logits (C == classes), any float dtype.
    target: (B,)   integer array of class indices in [0, C).
    Returns a scalar float32 loss.
    """
    assert pred.ndim == 2 and pred.shape[1] == classes
    if smoothing > 0.0 and classes < 2:
        raise ValueError("smoothing > 0 requires classes >= 2")
    b, c = pred.shape
    tgt2d = target.astype(jnp.int32).reshape(b, 1)

    vmem_cap = _vmem_capacity_bytes()
    if batch_tile is not None:
        tb = min(int(batch_tile), b)
        if tb < b:
            tb = max(8, (tb // 8) * 8)                # keep tiled blocks 8-aligned
    else:
        tb = _choose_batch_tile(b, c, pred.dtype.itemsize, vmem_cap)

    num_tiles = pl.cdiv(b, tb)
    padded_rows = num_tiles * tb                      # output padded to whole tiles

    # Generation-aware VMEM limit: actual footprint (with margin), never above ~85%
    # of physical VMEM (tight on v7x's 64 MiB, roomy on v5e/v6e's 128 MiB).
    est_bytes = tb * c * (2 * pred.dtype.itemsize + 6 * 4) + 4 * tb * 4 + (1 << 20)
    vmem_limit = min(int(0.85 * vmem_cap), max(32 * 1024 * 1024, 2 * est_bytes))

    kernel = functools.partial(
        _label_smoothing_loss_kernel,
        smoothing=float(smoothing),
        num_classes=int(classes),
    )

    per_row = pl.pallas_call(
        kernel,
        out_shape=jax.ShapeDtypeStruct((padded_rows, 1), jnp.float32),
        grid_spec=pltpu.PrefetchScalarGridSpec(
            num_scalar_prefetch=0,
            grid=(num_tiles,),
            in_specs=[
                pl.BlockSpec((tb, c), lambda i: (i, 0)),   # logits batch tile
                pl.BlockSpec((tb, 1), lambda i: (i, 0)),   # matching target tile
            ],
            out_specs=pl.BlockSpec((tb, 1), lambda i: (i, 0)),  # per-row losses
        ),
        compiler_params=pltpu.CompilerParams(
            dimension_semantics=("parallel",),        # independent tiles -> megacore
            vmem_limit_bytes=int(vmem_limit),
        ),
    )(pred, tgt2d)

    # Padded rows (garbage from the partial last input block) are sliced off here,
    # so they can never contaminate the mean. Division uses the TRUE batch size.
    return jnp.sum(per_row[:b, 0]) / jnp.float32(b)


def _reference_loss(pred, target, classes, smoothing):
    # Pure-JAX reference mirroring the PyTorch module, for sanity checks.
    logp = jax.nn.log_softmax(pred.astype(jnp.float32), axis=-1)
    conf = 1.0 - smoothing
    off = smoothing / (classes - 1) if classes > 1 else 0.0
    true_dist = jnp.full((pred.shape[0], classes), off, dtype=jnp.float32)
    true_dist = true_dist.at[jnp.arange(pred.shape[0]), target].set(conf)
    return jnp.mean(jnp.sum(-true_dist * logp, axis=-1))


if __name__ == "__main__":
    key = jax.random.PRNGKey(0)
    k_pred, k_tgt, k_pred2, k_tgt2 = jax.random.split(key, 4)

    # --- test 1: small canonical shapes, single tile, f32 ---
    batch, classes, smoothing = 8, 32, 0.1
    pred = jax.random.normal(k_pred, (batch, classes), dtype=jnp.float32)
    target = jax.random.randint(k_tgt, (batch,), 0, classes, dtype=jnp.int32)

    loss = label_smoothing_loss(pred, target, classes=classes, smoothing=smoothing)
    loss = jax.block_until_ready(loss)
    ref = _reference_loss(pred, target, classes, smoothing)
    assert jnp.allclose(loss, ref, rtol=1e-5, atol=1e-5), (loss, ref)

    # --- test 2: smoothing = 0 (pure one-hot NLL path) ---
    loss0 = jax.block_until_ready(
        label_smoothing_loss(pred, target, classes=classes, smoothing=0.0))
    ref0 = _reference_loss(pred, target, classes, 0.0)
    assert jnp.allclose(loss0, ref0, rtol=1e-5, atol=1e-5), (loss0, ref0)

    # --- test 3: multi-tile grid with a partial last tile (padded-output path) ---
    batch2 = 20
    pred2 = jax.random.normal(k_pred2, (batch2, classes), dtype=jnp.float32)
    target2 = jax.random.randint(k_tgt2, (batch2,), 0, classes, dtype=jnp.int32)
    loss2 = jax.block_until_ready(
        label_smoothing_loss(pred2, target2, classes=classes,
                             smoothing=smoothing, batch_tile=8))
    ref2 = _reference_loss(pred2, target2, classes, smoothing)
    assert jnp.allclose(loss2, ref2, rtol=1e-5, atol=1e-5), (loss2, ref2)

    # --- test 4: bf16 logits stay bf16 in HBM, cast to f32 per tile in-kernel ---
    pred_bf16 = pred.astype(jnp.bfloat16)
    loss_bf16 = jax.block_until_ready(
        label_smoothing_loss(pred_bf16, target, classes=classes,
                             smoothing=smoothing))
    ref_bf16 = _reference_loss(pred_bf16, target, classes, smoothing)
    assert jnp.allclose(loss_bf16, ref_bf16, rtol=1e-4, atol=1e-4), (loss_bf16, ref_bf16)

    print("KERNEL_OK")
</pallas_src>

<mosaic_0001>
module attributes {stable_mosaic.version = 11 : i64} {
  func.func @_label_smoothing_loss_kernel(%arg0: i32, %arg1: memref<8x32xf32, #tpu.memory_space<vmem>>, %arg2: memref<8x1xi32, #tpu.memory_space<vmem>>, %arg3: memref<8x1xf32, #tpu.memory_space<vmem>>) attributes {dimension_semantics = [#tpu.dimension_semantics<parallel>], iteration_bounds = array<i64: 1>, scalar_prefetch = 0 : i64, scratch_operands = 0 : i64, tpu.core_type = #tpu.core_type<tc>, window_params = [{transform_indices = @transform_0, window_bounds = array<i64: 8, 32>}, {transform_indices = @transform_1, window_bounds = array<i64: 8, 1>}, {transform_indices = @transform_2, window_bounds = array<i64: 8, 1>}]} {
    %c0 = arith.constant 0 : index
    %c0_0 = arith.constant 0 : index
    %0 = vector.load %arg1[%c0, %c0_0] : memref<8x32xf32, #tpu.memory_space<vmem>>, vector<8x32xf32>
    %c0_1 = arith.constant 0 : index
    %c0_2 = arith.constant 0 : index
    %1 = vector.load %arg2[%c0_1, %c0_2] : memref<8x1xi32, #tpu.memory_space<vmem>>, vector<8x1xi32>
    %cst = arith.constant dense<0xFF800000> : vector<8xf32>
    %2 = vector.multi_reduction <maximumf>, %0, %cst [1] : vector<8x32xf32> to vector<8xf32>
    %3 = vector.shape_cast %2 : vector<8xf32> to vector<8x1xf32>
    %4 = vector.broadcast %3 : vector<8x1xf32> to vector<8x32xf32>
    %5 = arith.subf %0, %4 : vector<8x32xf32>
    %6 = math.exp %5 : vector<8x32xf32>
    %cst_3 = arith.constant dense<0.000000e+00> : vector<8xf32>
    %7 = vector.multi_reduction <add>, %6, %cst_3 [1] : vector<8x32xf32> to vector<8xf32>
    %8 = vector.shape_cast %7 : vector<8xf32> to vector<8x1xf32>
    %9 = math.log %8 : vector<8x1xf32>
    %10 = tpu.iota {dimensions = array<i32: 1>} : vector<8x32xi32>
    %11 = vector.broadcast %1 : vector<8x1xi32> to vector<8x32xi32>
    %12 = arith.cmpi eq, %10, %11 : vector<8x32xi32>
    %cst_4 = arith.constant 0.899999976 : f32
    %cst_5 = arith.constant 0.0032258064 : f32
    %13 = vector.broadcast %cst_4 : f32 to vector<8x32xf32>
    %14 = vector.broadcast %cst_5 : f32 to vector<8x32xf32>
    %15 = arith.select %12, %13, %14 : vector<8x32xi1>, vector<8x32xf32>
    %16 = arith.mulf %15, %5 : vector<8x32xf32>
    %cst_6 = arith.constant dense<0.000000e+00> : vector<8xf32>
    %17 = vector.multi_reduction <add>, %16, %cst_6 [1] : vector<8x32xf32> to vector<8xf32>
    %18 = vector.shape_cast %17 : vector<8xf32> to vector<8x1xf32>
    %19 = arith.subf %9, %18 : vector<8x1xf32>
    %c0_7 = arith.constant 0 : index
    %c0_8 = arith.constant 0 : index
    %20 = vector.load %arg3[%c0_7, %c0_8] : memref<8x1xf32, #tpu.memory_space<vmem>>, vector<8x1xf32>
    tpu.vector_store %arg3[%c0_7, %c0_8], %19 {strides = array<i32>} : memref<8x1xf32, #tpu.memory_space<vmem>>, vector<8x1xf32>,
    return
  }
  func.func @transform_0(%arg0: i32) -> (i32, i32) {
    %c0_i32 = arith.constant 0 : i32
    %c0_i32_0 = arith.constant 0 : i32
    return %arg0, %c0_i32 : i32, i32
  }
  func.func @transform_1(%arg0: i32) -> (i32, i32) {
    %c0_i32 = arith.constant 0 : i32
    %c0_i32_0 = arith.constant 0 : i32
    return %arg0, %c0_i32 : i32, i32
  }
  func.func @transform_2(%arg0: i32) -> (i32, i32) {
    %c0_i32 = arith.constant 0 : i32
    %c0_i32_0 = arith.constant 0 : i32
    return %arg0, %c0_i32 : i32, i32
  }
}

</mosaic_0001>

<llo_original>
// kernel: tpu_custom_call.1
$region0: #{tpu_custom_call.1}
  #allocation0 [shape = 'u32[]', space=smem, size = 0x4, offset = 0x4, fixed_abs, tag = 'smem constant byte address 0x4 - core index']
  #allocation1 [shape = 'u32[144,128]{1,0:T(1,128)}', space=vmem, size = 0x12000, scoped, tag = 'internal scratch']
  %s0 = inlined_call_operand.vmem [shape: f32[8,32], index: 0, kind: input, shape index: {}]
  %s1 = inlined_call_operand.vmem [shape: s32[8,1], index: 1, kind: input, shape index: {}]
  %s2 = inlined_call_operand.vmem [shape: f32[8,1], index: 2, kind: output, shape index: {}]
  %s3 = sld [smem:[#allocation0]]
  $region18: #{tpu_custom_call.1} parent=0
    _
  %s5 = ssub.s32 1, %s3
  %s6 = scalar_select 0, %s5, %s3
  // Predicated region
  $region2: #{tpu_custom_call.1} parent=0 // pred_check
    _
  $region3: #{tpu_custom_call.1} parent=0 // pred_check_branch
    %8 = sbr.rel (0) target = $region5
  $region4: #{tpu_custom_call.1} parent=0 // pred_region
    _
  $region5: #{tpu_custom_call.1} parent=0 // pred_fallthru
    _
  // Predicated region
  $region6: #{tpu_custom_call.1} parent=0 // pred_check
    _
  $region7: #{tpu_custom_call.1} parent=0 // pred_check_branch
    %10 = sbr.rel (0) target = $region9
  $region8: #{tpu_custom_call.1} parent=0 // pred_region
    _
  $region9: #{tpu_custom_call.1} parent=0 // pred_fallthru
    _
  %v11 = vld [vmem:[%s0] sm:$0xff]
  %v12 = vld [vmem:[%s1] sm:$0xff]
  %vm13 = vcmask 261120
  %v14 = vsel %vm13, %v11, -inf
  %15 = vmax.xlane.f32.xlu0 %v14
  %v16 = vpop.xlane.xlu0 %15
  %v17 = vsub.f32 %v11, %v16
  %v18 = vmul.f32 %v17, 1.442695
  %v19 = vpow.pop %v18
  %v20 = vsel %vm13, %v19, 0.0
  %21 = vadd.xlane.f32.xlu0 %v20
  %v22 = vpop.xlane.xlu0 %21
  %v23 = vlog2.pop %v22
  %v24 = vmul.f32 %v23, 0.6931472
  %v25 = vlaneseq
  %v26 = vand.u32 %v25, 127
  %27 = vset.pattern.permute.xlu0 0
  %28 = vperm.xlu0 %27, %v12
  %v29 = vpop.permute.xlu0 %28
  %vm30 = vcmp.eq.s32.totalorder %v26, %v29
  %v31 = vsel %vm30, 0.9, 0.0032258064
  %v32 = vmul.f32 %v31, %v17
  %v33 = vsel %vm13, %v32, 0.0
  %34 = vadd.xlane.f32.xlu0 %v33
  %v35 = vpop.xlane.xlu0 %34
  %v36 = vsub.f32 %v24, %v35
  %vm37 = vcmask 7168
  %38 = vst.msk [vmem:[%s2] sm:$0xff] %vm37, %v36
  // Predicated region
  $region10: #{tpu_custom_call.1} parent=0 // pred_check
    _
  $region11: #{tpu_custom_call.1} parent=0 // pred_check_branch
    %40 = sbr.rel (0) target = $region13
  $region12: #{tpu_custom_call.1} parent=0 // pred_region
    _
  $region13: #{tpu_custom_call.1} parent=0 // pred_fallthru
    _
  // Predicated region
  $region14: #{tpu_custom_call.1} parent=0 // pred_check
    _
  $region15: #{tpu_custom_call.1} parent=0 // pred_check_branch
    %42 = sbr.rel (0) target = $region17
  $region16: #{tpu_custom_call.1} parent=0 // pred_region
    _
  $region17: #{tpu_custom_call.1} parent=0 // pred_fallthru
    _

</llo_original>
